<compile_context>
chip_gen: v6e
topology: v6e:2x2x1
jax: 0.10.0
libtpu: 0.0.40
codegen_flags: <defaults>
</compile_context>

<pallas_src>
import jax
import jax.numpy as jnp
from jax import lax
from jax.experimental import pallas as pl
from jax.experimental.pallas import tpu as pltpu


def _round_up(x, m):
    return (x + m - 1) // m * m


def _selu(x):
    alpha = 1.6732632423543772
    scale = 1.0507009873554805
    return scale * jnp.where(x > 0, x, alpha * (jnp.exp(x) - 1.0))


def wap_kernel(pow_ref, idx_ref, w_ref, x_ref, w1_ref, b1_ref, gw2_ref, gb2_ref,
               mw2_ref, mb2_ref, out_ref, m_sc, l_sc):
    NEG = jnp.float32(-1e30)   # finite sentinel -> empty segments never produce NaN
    EPS = jnp.float32(1e-10)

    step = pl.program_id(0)
    n_seg = m_sc.shape[1]      # padded segment count

    @pl.when(step == 0)
    def _init():
        m_sc[...] = jnp.full_like(m_sc, NEG)
        l_sc[...] = jnp.zeros_like(l_sc)
        out_ref[...] = jnp.zeros_like(out_ref)

    x = x_ref[...]             # [tn, D]
    idx = idx_ref[...]         # [tn, 1] int32
    w = w_ref[...]             # [tn, 1] f32
    p = pow_ref[0]             # scalar (SMEM)

    # ---- fused MLP front-end: a single [tn, Hm+Hg] matmul feeds both paths ----
    h = _selu(jnp.dot(x, w1_ref[...], preferred_element_type=jnp.float32)
              + b1_ref[...])                                         # [tn, Hm+Hg]

    # Gate head: one output column -> VPU mul + lane reduce (no extra MXU push).
    # gw2_ref is the gate head as a zero-padded ROW vector [1, Hm+Hg].
    gate = (jnp.sum(h * gw2_ref[...], axis=1, keepdims=True)
            + gb2_ref[...])                                          # [tn, 1]

    # Message head: mw2 zero-padded to [Hm+Hg, Dm] so no lane slice of h needed.
    message = _selu(jnp.dot(h, mw2_ref[...],
                            preferred_element_type=jnp.float32)
                    + mb2_ref[...])                                  # [tn, Dm]

    # ---- segment membership mask built in-kernel (no dense one-hot from HBM) ----
    seg_ids = lax.broadcasted_iota(jnp.int32, (x.shape[0], n_seg), 1)
    member = seg_ids == idx                                          # [tn, n_seg] bool
    onehot = member.astype(jnp.float32)

    # ---- online (flash-attention style) per-segment max ----
    tile_max = jnp.max(jnp.where(member, gate, NEG), axis=0, keepdims=True)  # [1, n_seg]
    m_old = m_sc[...]
    m_new = jnp.maximum(m_old, tile_max)
    alpha = jnp.exp(m_old - m_new)                                   # [1, n_seg], finite

    # gather updated per-segment max back to nodes (lane reduce, no matmul/transpose)
    node_m = jnp.sum(onehot * m_new, axis=1, keepdims=True)          # [tn, 1]

    # ---- weighted exponentiation, fused: w**p * exp(g) = exp(g + p*log(w)) ----
    logw = jnp.log(jnp.maximum(w, EPS))
    p_term = jnp.exp(gate - node_m + p * logw)                       # [tn, 1]
    # padded rows have an out-of-range segment id, so `onehot` masks them below.

    # ---- running softmax denominator per segment (sublane reduce, f32) ----
    l_sc[...] = alpha * l_sc[...] + jnp.sum(onehot * p_term, axis=0, keepdims=True)

    # ---- pooled numerator: mask^T @ (p_term * message), bf16 MXU, f32 accumulate ----
    msg_w = (p_term * message).astype(jnp.bfloat16)                  # [tn, Dm]
    acc_contrib = lax.dot_general(
        onehot.astype(jnp.bfloat16), msg_w,
        dimension_numbers=(((0,), (0,)), ((), ())),                  # contract over tn
        preferred_element_type=jnp.float32)                          # [n_seg, Dm]
    alpha_col = alpha.reshape(n_seg, 1)                              # tiny [1,S]->[S,1]
    out_ref[...] = alpha_col * out_ref[...] + acc_contrib
    m_sc[...] = m_new

    @pl.when(step == pl.num_programs(0) - 1)
    def _finalize():
        l_col = l_sc[...].reshape(n_seg, 1)
        out_ref[...] = out_ref[...] * pl.reciprocal(l_col + EPS, approx=True)


def weighted_attention_pooling(x, index, weights, params, num_segments, *, block_n=512):
    """x: [N, D], index: [N] int, weights: [N] or [N, 1]. Returns [num_segments, Dm]."""
    N, D = x.shape
    x = x.astype(jnp.float32)
    idx = index.astype(jnp.int32).reshape(N, 1)
    w = weights.astype(jnp.float32).reshape(N, 1)

    # ---- pack params: fused first layer [mw1 | gw1]; heads zero-padded to Hm+Hg ----
    gw1 = params["gw1"].astype(jnp.float32)
    gb1 = params["gb1"].astype(jnp.float32)
    gw2 = params["gw2"].astype(jnp.float32)
    gb2 = params["gb2"].astype(jnp.float32)
    mw1 = params["mw1"].astype(jnp.float32)
    mb1 = params["mb1"].astype(jnp.float32)
    mw2 = params["mw2"].astype(jnp.float32)
    mb2 = params["mb2"].astype(jnp.float32)
    hg, hm, dm = gw1.shape[1], mw1.shape[1], mw2.shape[1]
    h_all = hm + hg

    w1 = jnp.concatenate([mw1, gw1], axis=1)                                  # [D, Hm+Hg]
    b1 = jnp.concatenate([mb1.reshape(1, hm), gb1.reshape(1, hg)], axis=1)    # [1, Hm+Hg]
    # gate head as zero-padded row vector (consumed by VPU dot in the kernel)
    gw2_row = jnp.concatenate([jnp.zeros((1, hm), jnp.float32),
                               gw2.reshape(1, hg)], axis=1)                   # [1, Hm+Hg]
    gb2 = gb2.reshape(1, 1)
    # message head zero-padded over the gate-hidden rows (no lane slice of h needed)
    mw2p = jnp.concatenate([mw2, jnp.zeros((hg, dm), jnp.float32)], axis=0)   # [Hm+Hg, Dm]
    mb2 = mb2.reshape(1, dm)
    pow_arr = params["pow"].astype(jnp.float32).reshape(1)

    s_pad = _round_up(max(num_segments, 1), 8)

    # ---- tile / pad the node axis (padded rows get an out-of-range segment id) ----
    tn = min(block_n, _round_up(N, 8))
    n_pad = _round_up(N, tn)
    if n_pad != N:
        pad = n_pad - N
        x = jnp.pad(x, ((0, pad), (0, 0)))
        idx = jnp.pad(idx, ((0, pad), (0, 0)), constant_values=s_pad)
        w = jnp.pad(w, ((0, pad), (0, 0)), constant_values=1.0)
    n_tiles = n_pad // tn

    cost = pl.CostEstimate(
        flops=2 * n_pad * (D * h_all + h_all + h_all * dm + s_pad * dm),
        transcendentals=n_pad * (h_all + dm + 3),
        bytes_accessed=4 * (n_pad * (D + 2) + D * h_all + h_all * dm + s_pad * dm),
    )

    out = pl.pallas_call(
        wap_kernel,
        out_shape=jax.ShapeDtypeStruct((s_pad, dm), jnp.float32),
        grid=(n_tiles,),
        in_specs=[
            pl.BlockSpec(memory_space=pltpu.MemorySpace.SMEM),   # pow (scalar)
            pl.BlockSpec((tn, 1), lambda i: (i, 0)),             # index column
            pl.BlockSpec((tn, 1), lambda i: (i, 0)),             # weights column
            pl.BlockSpec((tn, D), lambda i: (i, 0)),             # x tile
            pl.BlockSpec((D, h_all), lambda i: (0, 0)),          # fused W1
            pl.BlockSpec((1, h_all), lambda i: (0, 0)),          # fused b1
            pl.BlockSpec((1, h_all), lambda i: (0, 0)),          # gate head row (zero-padded)
            pl.BlockSpec((1, 1), lambda i: (0, 0)),              # gate head b2
            pl.BlockSpec((h_all, dm), lambda i: (0, 0)),         # message W2 (zero-padded)
            pl.BlockSpec((1, dm), lambda i: (0, 0)),             # message b2
        ],
        out_specs=pl.BlockSpec((s_pad, dm), lambda i: (0, 0)),   # resident accumulator
        scratch_shapes=[pltpu.VMEM((1, s_pad), jnp.float32),     # running segment max
                        pltpu.VMEM((1, s_pad), jnp.float32)],    # running segment sum
        compiler_params=pltpu.CompilerParams(
            dimension_semantics=("arbitrary",),                  # reduction over N-tiles
            vmem_limit_bytes=32 * 1024 * 1024),
        cost_estimate=cost,
    )(pow_arr, idx, w, x, w1, b1, gw2_row, gb2, mw2p, mb2)

    # TODO(synk): if `index` is pre-sorted by segment, a scalar-prefetched offsets
    # table + data-dependent index_map could stream contiguous node ranges per
    # segment and skip the mask math entirely (O(N*Dm) instead of O(S*N*Dm)).
    return out[:num_segments]


def _reference(x, index, weights, params, num_segments):
    """Pure-JAX reference mirroring the PyTorch forward."""
    w = weights.reshape(-1, 1)
    h = _selu(x @ params["gw1"] + params["gb1"])
    gate = h @ params["gw2"] + params["gb2"]
    hm = _selu(x @ params["mw1"] + params["mb1"])
    message = _selu(hm @ params["mw2"] + params["mb2"])
    gate_max = jax.ops.segment_max(gate, index, num_segments)
    gate = gate - gate_max[index]
    safe_w = jnp.maximum(w, 1e-10)
    gate = jnp.power(safe_w, params["pow"][0]) * jnp.exp(gate)
    gate_sum = jax.ops.segment_sum(gate, index, num_segments)
    gate = gate / (gate_sum[index] + 1e-10)
    return jax.ops.segment_sum(gate * message, index, num_segments)


if __name__ == "__main__":
    key = jax.random.PRNGKey(0)

    def make_params(k, d_in, hg, hm, dm):
        ks = jax.random.split(k, 9)
        return {
            "gw1": jax.random.normal(ks[0], (d_in, hg), jnp.float32) * 0.1,
            "gb1": jax.random.normal(ks[1], (1, hg), jnp.float32) * 0.1,
            "gw2": jax.random.normal(ks[2], (hg, 1), jnp.float32) * 0.1,
            "gb2": jax.random.normal(ks[3], (1, 1), jnp.float32) * 0.1,
            "mw1": jax.random.normal(ks[4], (d_in, hm), jnp.float32) * 0.1,
            "mb1": jax.random.normal(ks[5], (1, hm), jnp.float32) * 0.1,
            "mw2": jax.random.normal(ks[6], (hm, dm), jnp.float32) * 0.1,
            "mb2": jax.random.normal(ks[7], (1, dm), jnp.float32) * 0.1,
            "pow": jax.random.normal(ks[8], (1,), jnp.float32),
        }

    # ---- test 1: tiny case (single tile), gate [32,1], message [64,128] ----
    D, S = 32, 2
    params = make_params(jax.random.fold_in(key, 0), D, 32, 64, 128)
    x = jax.random.normal(jax.random.fold_in(key, 1), (8, D), jnp.float32)
    index = jnp.array([0, 0, 0, 1, 1, 1, 1, 0], dtype=jnp.int32)
    weights = jax.random.uniform(jax.random.fold_in(key, 2), (8,), jnp.float32, 0.1, 1.0)

    out = jax.block_until_ready(weighted_attention_pooling(x, index, weights, params, S))
    ref = _reference(x, index, weights, params, S)
    assert out.shape == (S, 128)
    # bf16 pooling matmul (f32 accumulate) + approx reciprocal => loosened tolerance
    assert jnp.allclose(out, ref, atol=5e-3, rtol=2e-2), (
        "small-case mismatch, max abs err %e" % float(jnp.max(jnp.abs(out - ref))))

    # ---- test 2: multi-tile case with node padding and an empty segment ----
    N2, D2, S2 = 1000, 48, 5
    params2 = make_params(jax.random.fold_in(key, 3), D2, 32, 64, 128)
    x2 = jax.random.normal(jax.random.fold_in(key, 4), (N2, D2), jnp.float32)
    index2 = jax.random.randint(jax.random.fold_in(key, 5), (N2,), 0, S2, jnp.int32)
    index2 = jnp.where(index2 == 3, 4, index2)   # segment 3 intentionally empty
    weights2 = jax.random.uniform(jax.random.fold_in(key, 6), (N2,), jnp.float32, 0.1, 2.0)

    out2 = jax.block_until_ready(
        weighted_attention_pooling(x2, index2, weights2, params2, S2, block_n=512))
    ref2 = _reference(x2, index2, weights2, params2, S2)
    assert out2.shape == (S2, 128)
    assert bool(jnp.all(jnp.abs(out2[3]) < 1e-6)), "empty segment should pool to zero"
    assert jnp.allclose(out2, ref2, atol=5e-3, rtol=2e-2), (
        "large-case mismatch, max abs err %e" % float(jnp.max(jnp.abs(out2 - ref2))))

    print("KERNEL_OK")
</pallas_src>

<mosaic_0001>
module attributes {stable_mosaic.version = 11 : i64} {
  func.func @wap_kernel(%arg0: i32, %arg1: memref<1xf32, #tpu.memory_space<smem>>, %arg2: memref<8x1xi32, #tpu.memory_space<vmem>>, %arg3: memref<8x1xf32, #tpu.memory_space<vmem>>, %arg4: memref<8x32xf32, #tpu.memory_space<vmem>>, %arg5: memref<32x96xf32, #tpu.memory_space<vmem>>, %arg6: memref<1x96xf32, #tpu.memory_space<vmem>>, %arg7: memref<1x96xf32, #tpu.memory_space<vmem>>, %arg8: memref<1x1xf32, #tpu.memory_space<vmem>>, %arg9: memref<96x128xf32, #tpu.memory_space<vmem>>, %arg10: memref<1x128xf32, #tpu.memory_space<vmem>>, %arg11: memref<8x128xf32, #tpu.memory_space<vmem>>, %arg12: memref<1x8xf32, #tpu.memory_space<vmem>>, %arg13: memref<1x8xf32, #tpu.memory_space<vmem>>) attributes {dimension_semantics = [#tpu.dimension_semantics<arbitrary>], iteration_bounds = array<i64: 1>, scalar_prefetch = 0 : i64, scratch_operands = 2 : i64, tpu.core_type = #tpu.core_type<tc>, window_params = [{transform_indices = @transform_0, window_bounds = array<i64: 1>}, {transform_indices = @transform_1, window_bounds = array<i64: 8, 1>}, {transform_indices = @transform_2, window_bounds = array<i64: 8, 1>}, {transform_indices = @transform_3, window_bounds = array<i64: 8, 32>}, {pipeline_mode = #tpu.pipeline_mode<synchronous>, transform_indices = @transform_4, window_bounds = array<i64: 32, 96>}, {pipeline_mode = #tpu.pipeline_mode<synchronous>, transform_indices = @transform_5, window_bounds = array<i64: 1, 96>}, {pipeline_mode = #tpu.pipeline_mode<synchronous>, transform_indices = @transform_6, window_bounds = array<i64: 1, 96>}, {pipeline_mode = #tpu.pipeline_mode<synchronous>, transform_indices = @transform_7, window_bounds = array<i64: 1, 1>}, {pipeline_mode = #tpu.pipeline_mode<synchronous>, transform_indices = @transform_8, window_bounds = array<i64: 96, 128>}, {pipeline_mode = #tpu.pipeline_mode<synchronous>, transform_indices = @transform_9, window_bounds = array<i64: 1, 128>}, {pipeline_mode = #tpu.pipeline_mode<synchronous>, transform_indices = @transform_10, window_bounds = array<i64: 8, 128>}]} {
    %c0_i32 = arith.constant 0 : i32
    %0 = arith.cmpi eq, %arg0, %c0_i32 : i32
    %1 = arith.extui %0 : i1 to i32
    %cst = arith.constant -1.000000e+30 : f32
    %c0_i32_0 = arith.constant 0 : i32
    %2 = arith.cmpi ne, %1, %c0_i32_0 : i32
    scf.if %2 {
      %95 = vector.broadcast %cst : f32 to vector<1x8xf32>
      %c0_51 = arith.constant 0 : index
      %c0_52 = arith.constant 0 : index
      %96 = vector.load %arg12[%c0_51, %c0_52] : memref<1x8xf32, #tpu.memory_space<vmem>>, vector<1x8xf32>
      tpu.vector_store %arg12[%c0_51, %c0_52], %95 {strides = array<i32>} : memref<1x8xf32, #tpu.memory_space<vmem>>, vector<1x8xf32>,
      %cst_53 = arith.constant 0.000000e+00 : f32
      %97 = vector.broadcast %cst_53 : f32 to vector<1x8xf32>
      %c0_54 = arith.constant 0 : index
      %c0_55 = arith.constant 0 : index
      %98 = vector.load %arg13[%c0_54, %c0_55] : memref<1x8xf32, #tpu.memory_space<vmem>>, vector<1x8xf32>
      tpu.vector_store %arg13[%c0_54, %c0_55], %97 {strides = array<i32>} : memref<1x8xf32, #tpu.memory_space<vmem>>, vector<1x8xf32>,
      %cst_56 = arith.constant 0.000000e+00 : f32
      %99 = vector.broadcast %cst_56 : f32 to vector<8x128xf32>
      %c0_57 = arith.constant 0 : index
      %c0_58 = arith.constant 0 : index
      %100 = vector.load %arg11[%c0_57, %c0_58] : memref<8x128xf32, #tpu.memory_space<vmem>>, vector<8x128xf32>
      tpu.vector_store %arg11[%c0_57, %c0_58], %99 {strides = array<i32>} : memref<8x128xf32, #tpu.memory_space<vmem>>, vector<8x128xf32>,
    } else {
    }
    %c0 = arith.constant 0 : index
    %c0_1 = arith.constant 0 : index
    %3 = vector.load %arg4[%c0, %c0_1] : memref<8x32xf32, #tpu.memory_space<vmem>>, vector<8x32xf32>
    %c0_2 = arith.constant 0 : index
    %c0_3 = arith.constant 0 : index
    %4 = vector.load %arg2[%c0_2, %c0_3] : memref<8x1xi32, #tpu.memory_space<vmem>>, vector<8x1xi32>
    %c0_4 = arith.constant 0 : index
    %c0_5 = arith.constant 0 : index
    %5 = vector.load %arg3[%c0_4, %c0_5] : memref<8x1xf32, #tpu.memory_space<vmem>>, vector<8x1xf32>
    %c0_6 = arith.constant 0 : index
    %6 = memref.load %arg1[%c0_6] : memref<1xf32, #tpu.memory_space<smem>>
    %c0_7 = arith.constant 0 : index
    %c0_8 = arith.constant 0 : index
    %7 = vector.load %arg5[%c0_7, %c0_8] : memref<32x96xf32, #tpu.memory_space<vmem>>, vector<32x96xf32>
    %cst_9 = arith.constant dense<0.000000e+00> : vector<8x96xf32>
    %8 = tpu.matmul %3, %7, %cst_9 {dimension_numbers = #tpu.dot_dimension_numbers<[1], [0], [0], [1], [0, 0, 1, 1], [], []>} : vector<8x32xf32>, vector<32x96xf32>, vector<8x96xf32> -> vector<8x96xf32>
    %c0_10 = arith.constant 0 : index
    %c0_11 = arith.constant 0 : index
    %9 = vector.load %arg6[%c0_10, %c0_11] : memref<1x96xf32, #tpu.memory_space<vmem>>, vector<1x96xf32>
    %10 = vector.broadcast %9 : vector<1x96xf32> to vector<8x96xf32>
    %11 = arith.addf %8, %10 : vector<8x96xf32>
    %cst_12 = arith.constant 0.000000e+00 : f32
    %12 = vector.broadcast %cst_12 : f32 to vector<8x96xf32>
    %13 = arith.cmpf ogt, %11, %12 : vector<8x96xf32>
    %14 = math.exp %11 : vector<8x96xf32>
    %cst_13 = arith.constant 1.000000e+00 : f32
    %15 = vector.broadcast %cst_13 : f32 to vector<8x96xf32>
    %16 = arith.subf %14, %15 : vector<8x96xf32>
    %cst_14 = arith.constant 1.67326319 : f32
    %17 = vector.broadcast %cst_14 : f32 to vector<8x96xf32>
    %18 = arith.mulf %17, %16 : vector<8x96xf32>
    %19 = arith.select %13, %11, %18 : vector<8x96xi1>, vector<8x96xf32>
    %cst_15 = arith.constant 1.05070102 : f32
    %20 = vector.broadcast %cst_15 : f32 to vector<8x96xf32>
    %21 = arith.mulf %20, %19 : vector<8x96xf32>
    %c0_16 = arith.constant 0 : index
    %c0_17 = arith.constant 0 : index
    %22 = vector.load %arg7[%c0_16, %c0_17] : memref<1x96xf32, #tpu.memory_space<vmem>>, vector<1x96xf32>
    %23 = vector.broadcast %22 : vector<1x96xf32> to vector<8x96xf32>
    %24 = arith.mulf %21, %23 : vector<8x96xf32>
    %cst_18 = arith.constant dense<0.000000e+00> : vector<8xf32>
    %25 = vector.multi_reduction <add>, %24, %cst_18 [1] : vector<8x96xf32> to vector<8xf32>
    %26 = vector.shape_cast %25 : vector<8xf32> to vector<8x1xf32>
    %c0_19 = arith.constant 0 : index
    %c0_20 = arith.constant 0 : index
    %27 = vector.load %arg8[%c0_19, %c0_20] : memref<1x1xf32, #tpu.memory_space<vmem>>, vector<1x1xf32>
    %28 = vector.broadcast %27 : vector<1x1xf32> to vector<8x1xf32>
    %29 = arith.addf %26, %28 : vector<8x1xf32>
    %c0_21 = arith.constant 0 : index
    %c0_22 = arith.constant 0 : index
    %30 = vector.load %arg9[%c0_21, %c0_22] : memref<96x128xf32, #tpu.memory_space<vmem>>, vector<96x128xf32>
    %cst_23 = arith.constant dense<0.000000e+00> : vector<8x128xf32>
    %31 = tpu.matmul %21, %30, %cst_23 {dimension_numbers = #tpu.dot_dimension_numbers<[1], [0], [0], [1], [0, 0, 1, 1], [], []>} : vector<8x96xf32>, vector<96x128xf32>, vector<8x128xf32> -> vector<8x128xf32>
    %c0_24 = arith.constant 0 : index
    %c0_25 = arith.constant 0 : index
    %32 = vector.load %arg10[%c0_24, %c0_25] : memref<1x128xf32, #tpu.memory_space<vmem>>, vector<1x128xf32>
    %33 = vector.broadcast %32 : vector<1x128xf32> to vector<8x128xf32>
    %34 = arith.addf %31, %33 : vector<8x128xf32>
    %cst_26 = arith.constant 0.000000e+00 : f32
    %35 = vector.broadcast %cst_26 : f32 to vector<8x128xf32>
    %36 = arith.cmpf ogt, %34, %35 : vector<8x128xf32>
    %37 = math.exp %34 : vector<8x128xf32>
    %cst_27 = arith.constant 1.000000e+00 : f32
    %38 = vector.broadcast %cst_27 : f32 to vector<8x128xf32>
    %39 = arith.subf %37, %38 : vector<8x128xf32>
    %cst_28 = arith.constant 1.67326319 : f32
    %40 = vector.broadcast %cst_28 : f32 to vector<8x128xf32>
    %41 = arith.mulf %40, %39 : vector<8x128xf32>
    %42 = arith.select %36, %34, %41 : vector<8x128xi1>, vector<8x128xf32>
    %cst_29 = arith.constant 1.05070102 : f32
    %43 = vector.broadcast %cst_29 : f32 to vector<8x128xf32>
    %44 = arith.mulf %43, %42 : vector<8x128xf32>
    %45 = tpu.iota {dimensions = array<i32: 1>} : vector<8x8xi32>
    %46 = vector.broadcast %4 : vector<8x1xi32> to vector<8x8xi32>
    %47 = arith.cmpi eq, %45, %46 : vector<8x8xi32>
    %48 = arith.extui %47 : vector<8x8xi1> to vector<8x8xi32>
    %49 = arith.sitofp %48 : vector<8x8xi32> to vector<8x8xf32>
    %cst_30 = arith.constant -1.000000e+30 : f32
    %50 = vector.shape_cast %29 : vector<8x1xf32> to vector<8x1xf32>
    %51 = vector.broadcast %50 : vector<8x1xf32> to vector<8x8xf32>
    %52 = vector.broadcast %cst_30 : f32 to vector<8x8xf32>
    %53 = arith.select %47, %51, %52 : vector<8x8xi1>, vector<8x8xf32>
    %cst_31 = arith.constant dense<0xFF800000> : vector<8xf32>
    %54 = vector.multi_reduction <maximumf>, %53, %cst_31 [0] : vector<8x8xf32> to vector<8xf32>
    %55 = vector.shape_cast %54 : vector<8xf32> to vector<1x8xf32>
    %c0_32 = arith.constant 0 : index
    %c0_33 = arith.constant 0 : index
    %56 = vector.load %arg12[%c0_32, %c0_33] : memref<1x8xf32, #tpu.memory_space<vmem>>, vector<1x8xf32>
    %57 = arith.maximumf %56, %55 : vector<1x8xf32>
    %58 = arith.subf %56, %57 : vector<1x8xf32>
    %59 = math.exp %58 : vector<1x8xf32>
    %60 = vector.broadcast %57 : vector<1x8xf32> to vector<8x8xf32>
    %61 = arith.mulf %49, %60 : vector<8x8xf32>
    %cst_34 = arith.constant dense<0.000000e+00> : vector<8xf32>
    %62 = vector.multi_reduction <add>, %61, %cst_34 [1] : vector<8x8xf32> to vector<8xf32>
    %63 = vector.shape_cast %62 : vector<8xf32> to vector<8x1xf32>
    %cst_35 = arith.constant 1.000000e-10 : f32
    %64 = vector.broadcast %cst_35 : f32 to vector<8x1xf32>
    %65 = arith.maximumf %5, %64 : vector<8x1xf32>
    %66 = math.log %65 : vector<8x1xf32>
    %67 = arith.subf %29, %63 : vector<8x1xf32>
    %68 = vector.broadcast %6 : f32 to vector<8x1xf32>
    %69 = arith.mulf %68, %66 : vector<8x1xf32>
    %70 = arith.addf %67, %69 : vector<8x1xf32>
    %71 = math.exp %70 : vector<8x1xf32>
    %c0_36 = arith.constant 0 : index
    %c0_37 = arith.constant 0 : index
    %72 = vector.load %arg13[%c0_36, %c0_37] : memref<1x8xf32, #tpu.memory_space<vmem>>, vector<1x8xf32>
    %73 = arith.mulf %59, %72 : vector<1x8xf32>
    %74 = vector.broadcast %71 : vector<8x1xf32> to vector<8x8xf32>
    %75 = arith.mulf %49, %74 : vector<8x8xf32>
    %cst_38 = arith.constant dense<0.000000e+00> : vector<8xf32>
    %76 = vector.multi_reduction <add>, %75, %cst_38 [0] : vector<8x8xf32> to vector<8xf32>
    %77 = vector.shape_cast %76 : vector<8xf32> to vector<1x8xf32>
    %78 = arith.addf %73, %77 : vector<1x8xf32>
    %c0_39 = arith.constant 0 : index
    %c0_40 = arith.constant 0 : index
    %79 = vector.load %arg13[%c0_39, %c0_40] : memref<1x8xf32, #tpu.memory_space<vmem>>, vector<1x8xf32>
    tpu.vector_store %arg13[%c0_39, %c0_40], %78 {strides = array<i32>} : memref<1x8xf32, #tpu.memory_space<vmem>>, vector<1x8xf32>,
    %80 = vector.broadcast %71 : vector<8x1xf32> to vector<8x128xf32>
    %81 = arith.mulf %80, %44 : vector<8x128xf32>
    %82 = arith.truncf %81 : vector<8x128xf32> to vector<8x128xbf16>
    %83 = arith.truncf %49 : vector<8x8xf32> to vector<8x8xbf16>
    %cst_41 = arith.constant dense<0.000000e+00> : vector<8x128xf32>
    %84 = tpu.matmul %83, %82, %cst_41 {dimension_numbers = #tpu.dot_dimension_numbers<[0], [0], [1], [1], [0, 1, 1, 1], [], []>} : vector<8x8xbf16>, vector<8x128xbf16>, vector<8x128xf32> -> vector<8x128xf32>
    %85 = vector.shape_cast %59 : vector<1x8xf32> to vector<8x1xf32>
    %c0_42 = arith.constant 0 : index
    %c0_43 = arith.constant 0 : index
    %86 = vector.load %arg11[%c0_42, %c0_43] : memref<8x128xf32, #tpu.memory_space<vmem>>, vector<8x128xf32>
    %87 = vector.broadcast %85 : vector<8x1xf32> to vector<8x128xf32>
    %88 = arith.mulf %87, %86 : vector<8x128xf32>
    %89 = arith.addf %88, %84 : vector<8x128xf32>
    %c0_44 = arith.constant 0 : index
    %c0_45 = arith.constant 0 : index
    %90 = vector.load %arg11[%c0_44, %c0_45] : memref<8x128xf32, #tpu.memory_space<vmem>>, vector<8x128xf32>
    tpu.vector_store %arg11[%c0_44, %c0_45], %89 {strides = array<i32>} : memref<8x128xf32, #tpu.memory_space<vmem>>, vector<8x128xf32>,
    %c0_46 = arith.constant 0 : index
    %c0_47 = arith.constant 0 : index
    %91 = vector.load %arg12[%c0_46, %c0_47] : memref<1x8xf32, #tpu.memory_space<vmem>>, vector<1x8xf32>
    tpu.vector_store %arg12[%c0_46, %c0_47], %57 {strides = array<i32>} : memref<1x8xf32, #tpu.memory_space<vmem>>, vector<1x8xf32>,
    %c0_i32_48 = arith.constant 0 : i32
    %92 = arith.cmpi eq, %arg0, %c0_i32_48 : i32
    %93 = arith.extui %92 : i1 to i32
    %cst_49 = arith.constant 1.000000e-10 : f32
    %c0_i32_50 = arith.constant 0 : i32
    %94 = arith.cmpi ne, %93, %c0_i32_50 : i32
    scf.if %94 {
      %c0_51 = arith.constant 0 : index
      %c0_52 = arith.constant 0 : index
      %95 = vector.load %arg13[%c0_51, %c0_52] : memref<1x8xf32, #tpu.memory_space<vmem>>, vector<1x8xf32>
      %96 = vector.shape_cast %95 : vector<1x8xf32> to vector<8x1xf32>
      %c0_53 = arith.constant 0 : index
      %c0_54 = arith.constant 0 : index
      %97 = vector.load %arg11[%c0_53, %c0_54] : memref<8x128xf32, #tpu.memory_space<vmem>>, vector<8x128xf32>
      %98 = vector.broadcast %cst_49 : f32 to vector<8x1xf32>
      %99 = arith.addf %96, %98 : vector<8x1xf32>
      %100 = tpu.reciprocal %99 {approx = true} : vector<8x1xf32> -> vector<8x1xf32>
      %101 = vector.broadcast %100 : vector<8x1xf32> to vector<8x128xf32>
      %102 = arith.mulf %97, %101 : vector<8x128xf32>
      %c0_55 = arith.constant 0 : index
      %c0_56 = arith.constant 0 : index
      %103 = vector.load %arg11[%c0_55, %c0_56] : memref<8x128xf32, #tpu.memory_space<vmem>>, vector<8x128xf32>
      tpu.vector_store %arg11[%c0_55, %c0_56], %102 {strides = array<i32>} : memref<8x128xf32, #tpu.memory_space<vmem>>, vector<8x128xf32>,
    } else {
    }
    return
  }
  func.func @transform_0(%arg0: i32) -> i32 {
    %c0_i32 = arith.constant 0 : i32
    %c0_i32_0 = arith.constant 0 : i32
    return %c0_i32 : i32
  }
  func.func @transform_1(%arg0: i32) -> (i32, i32) {
    %c0_i32 = arith.constant 0 : i32
    %c0_i32_0 = arith.constant 0 : i32
    return %arg0, %c0_i32 : i32, i32
  }
  func.func @transform_2(%arg0: i32) -> (i32, i32) {
    %c0_i32 = arith.constant 0 : i32
    %c0_i32_0 = arith.constant 0 : i32
    return %arg0, %c0_i32 : i32, i32
  }
  func.func @transform_3(%arg0: i32) -> (i32, i32) {
    %c0_i32 = arith.constant 0 : i32
    %c0_i32_0 = arith.constant 0 : i32
    return %arg0, %c0_i32 : i32, i32
  }
  func.func @transform_4(%arg0: i32) -> (i32, i32) {
    %c0_i32 = arith.constant 0 : i32
    %c0_i32_0 = arith.constant 0 : i32
    %c0_i32_1 = arith.constant 0 : i32
    return %c0_i32, %c0_i32_0 : i32, i32
  }
  func.func @transform_5(%arg0: i32) -> (i32, i32) {
    %c0_i32 = arith.constant 0 : i32
    %c0_i32_0 = arith.constant 0 : i32
    %c0_i32_1 = arith.constant 0 : i32
    return %c0_i32, %c0_i32_0 : i32, i32
  }
  func.func @transform_6(%arg0: i32) -> (i32, i32) {
    %c0_i32 = arith.constant 0 : i32
    %c0_i32_0 = arith.constant 0 : i32
    %c0_i32_1 = arith.constant 0 : i32
    return %c0_i32, %c0_i32_0 : i32, i32
  }
  func.func @transform_7(%arg0: i32) -> (i32, i32) {
    %c0_i32 = arith.constant 0 : i32
    %c0_i32_0 = arith.constant 0 : i32
    %c0_i32_1 = arith.constant 0 : i32
    return %c0_i32, %c0_i32_0 : i32, i32
  }
  func.func @transform_8(%arg0: i32) -> (i32, i32) {
    %c0_i32 = arith.constant 0 : i32
    %c0_i32_0 = arith.constant 0 : i32
    %c0_i32_1 = arith.constant 0 : i32
    return %c0_i32, %c0_i32_0 : i32, i32
  }
  func.func @transform_9(%arg0: i32) -> (i32, i32) {
    %c0_i32 = arith.constant 0 : i32
    %c0_i32_0 = arith.constant 0 : i32
    %c0_i32_1 = arith.constant 0 : i32
    return %c0_i32, %c0_i32_0 : i32, i32
  }
  func.func @transform_10(%arg0: i32) -> (i32, i32) {
    %c0_i32 = arith.constant 0 : i32
    %c0_i32_0 = arith.constant 0 : i32
    %c0_i32_1 = arith.constant 0 : i32
    return %c0_i32, %c0_i32_0 : i32, i32
  }
}

</mosaic_0001>

<llo_original>
// kernel: tpu_custom_call.1
$region0: #{tpu_custom_call.1}
  #allocation0 [shape = 'u32[]', space=smem, size = 0x4, offset = 0x4, fixed_abs, tag = 'smem constant byte address 0x4 - core index']
  #allocation1 [shape = 'u32[144,128]{1,0:T(1,128)}', space=vmem, size = 0x12000, scoped, tag = 'internal scratch']
  #allocation2 [shape = 'f32[1,8]{1,0:T(1,128)}', space=vmem, size = 0x200, scoped, tag = 'scratch operand']
  #allocation3 [shape = 'f32[1,8]{1,0:T(1,128)}', space=vmem, size = 0x200, scoped, tag = 'scratch operand']
  #allocation4 [shape = 'f32[1]{0:T(128)S(6)}', space=smem, size = 0x200, scoped, tag = 'scoped memory for tpu_custom_call.1']
  #allocation5 [shape = 'f32[1,1]{1,0:T(1,128)S(1)}', space=vmem, size = 0x200, scoped, tag = 'scoped memory for tpu_custom_call.1']
  %s0 = inlined_call_operand.<no memory space> [shape: f32[1], index: 0, kind: input, shape index: {}]
  %s1 = inlined_call_operand.vmem [shape: s32[8,1], index: 1, kind: input, shape index: {}]
  %s2 = inlined_call_operand.vmem [shape: f32[8,1], index: 2, kind: input, shape index: {}]
  %s3 = inlined_call_operand.vmem [shape: f32[8,32], index: 3, kind: input, shape index: {}]
  %s4 = inlined_call_operand.hbm [shape: f32[32,96], index: 4, kind: input, shape index: {}]
  %s5 = inlined_call_operand.vmem [shape: f32[1,96], index: 5, kind: input, shape index: {}]
  %s6 = inlined_call_operand.vmem [shape: f32[1,96], index: 6, kind: input, shape index: {}]
  %s7 = inlined_call_operand.<no memory space> [shape: f32[1,1], index: 7, kind: input, shape index: {}]
  %s8 = inlined_call_operand.hbm [shape: f32[96,128], index: 8, kind: input, shape index: {}]
  %s9 = inlined_call_operand.vmem [shape: f32[1,128], index: 9, kind: input, shape index: {}]
  %s10 = inlined_call_operand.hbm [shape: f32[8,128], index: 10, kind: output, shape index: {}]
  %s11 = sld [smem:[#allocation0]]
  $region66: #{tpu_custom_call.1} parent=0
    _
  %s13 = ssub.s32 1, %s11
  %s14 = scalar_select 0, %s13, %s11
  %15 = sst [smem:[#allocation4]] %s0
  %v16 = vstv %s7
  %17 = vst [vmem:[#allocation5] sm:$0x1] %v16
  $region1: #{tpu_custom_call.1} parent=0
    #allocation6 [shape = 'u8[16384]{0}', space=vmem, size = 0x4000, scoped, tag = 'input window, operand 4, single buffered']
    #allocation7 [shape = 's32[1]{0}', space=sflag, size = 0x4, scoped, tag = 'scoped memory for tpu_custom_call.1']
    #allocation8 [shape = 's32[1]{0}', space=sflag, size = 0x4, scoped, tag = 'scoped memory for tpu_custom_call.1']
    #allocation9 [shape = 'u8[49152]{0}', space=vmem, size = 0xc000, scoped, tag = 'input window, operand 8, single buffered']
    #allocation10 [shape = 's32[1]{0}', space=sflag, size = 0x4, scoped, tag = 'scoped memory for tpu_custom_call.1']
    #allocation11 [shape = 'u8[4096]{0}', space=vmem, size = 0x1000, scoped, tag = 'output window, operand 0, single buffered']
    %18 = vsyncpa [#allocation7], 0
    %19 = vsyncpa [#allocation10], 0
    %20 = vsyncpa [#allocation8], 0
    // Predicated region
    $region2: #{tpu_custom_call.1} parent=1 // pred_check
      _
    $region3: #{tpu_custom_call.1} parent=1 // pred_check_branch
      %22 = sbr.rel (0) target = $region5
    $region4: #{tpu_custom_call.1} parent=1 // pred_region
      _
    $region5: #{tpu_custom_call.1} parent=1 // pred_fallthru
      _
    // Predicated region
    $region6: #{tpu_custom_call.1} parent=1 // pred_check
      _
    $region7: #{tpu_custom_call.1} parent=1 // pred_check_branch
      %24 = sbr.rel (0) target = $region9
    $region8: #{tpu_custom_call.1} parent=1 // pred_region
      _
    $region9: #{tpu_custom_call.1} parent=1 // pred_fallthru
      _
    // Predicated region
    $region10: #{tpu_custom_call.1} parent=1 // pred_check
      _
    $region11: #{tpu_custom_call.1} parent=1 // pred_check_branch
      %26 = sbr.rel (0) target = $region13
    $region12: #{tpu_custom_call.1} parent=1 // pred_region
      _
    $region13: #{tpu_custom_call.1} parent=1 // pred_fallthru
      _
    // Predicated region
    $region14: #{tpu_custom_call.1} parent=1 // pred_check
      _
    $region15: #{tpu_custom_call.1} parent=1 // pred_check_branch
      %28 = sbr.rel (0) target = $region17
    $region16: #{tpu_custom_call.1} parent=1 // pred_region
      _
    $region17: #{tpu_custom_call.1} parent=1 // pred_fallthru
      _
    // Predicated region
    $region18: #{tpu_custom_call.1} parent=1 // pred_check
      _
    $region19: #{tpu_custom_call.1} parent=1 // pred_check_branch
      %30 = sbr.rel (0) target = $region21
    $region20: #{tpu_custom_call.1} parent=1 // pred_region
      %s32 = ssub.s32 512, 512
      %33 = vsyncadd [#allocation7], %s32
      %s34 = sshll.u32 [#allocation6], 4
      %s35 = int_to_ptr.vmem [resolvable:$true] %s34
      %40 = dma.hbm_to_vmem [thread:$0]  %s4, 512, %s35, [#allocation7], 128, 128, 8
    $region21: #{tpu_custom_call.1} parent=1 // pred_fallthru
      _
    // Predicated region
    $region22: #{tpu_custom_call.1} parent=1 // pred_check
      _
    $region23: #{tpu_custom_call.1} parent=1 // pred_check_branch
      %42 = sbr.rel (0) target = $region25
    $region24: #{tpu_custom_call.1} parent=1 // pred_region
      _
    $region25: #{tpu_custom_call.1} parent=1 // pred_fallthru
      _
    // Predicated region
    $region26: #{tpu_custom_call.1} parent=1 // pred_check
      _
    $region27: #{tpu_custom_call.1} parent=1 // pred_check_branch
      %44 = sbr.rel (0) target = $region29
    $region28: #{tpu_custom_call.1} parent=1 // pred_region
      _
    $region29: #{tpu_custom_call.1} parent=1 // pred_fallthru
      _
    // Predicated region
    $region30: #{tpu_custom_call.1} parent=1 // pred_check
      _
    $region31: #{tpu_custom_call.1} parent=1 // pred_check_branch
      %46 = sbr.rel (0) target = $region33
    $region32: #{tpu_custom_call.1} parent=1 // pred_region
      _
    $region33: #{tpu_custom_call.1} parent=1 // pred_fallthru
      _
    // Predicated region
    $region34: #{tpu_custom_call.1} parent=1 // pred_check
      _
    $region35: #{tpu_custom_call.1} parent=1 // pred_check_branch
      %48 = sbr.rel (0) target = $region37
    $region36: #{tpu_custom_call.1} parent=1 // pred_region
      %s50 = ssub.s32 1536, 1536
      %51 = vsyncadd [#allocation10], %s50
      %s52 = sshll.u32 [#allocation9], 4
      %s53 = int_to_ptr.vmem [resolvable:$true] %s52
      %58 = dma.hbm_to_vmem [thread:$0]  %s8, 1536, %s53, [#allocation10], 128, 128, 8
    $region37: #{tpu_custom_call.1} parent=1 // pred_fallthru
      _
    // Predicated region
    $region38: #{tpu_custom_call.1} parent=1 // pred_check
      _
    $region39: #{tpu_custom_call.1} parent=1 // pred_check_branch
      %60 = sbr.rel (0) target = $region41
    $region40: #{tpu_custom_call.1} parent=1 // pred_region
      _
    $region41: #{tpu_custom_call.1} parent=1 // pred_fallthru
      _
    // Predicated region
    $region42: #{tpu_custom_call.1} parent=1 // pred_check
      _
    $region43: #{tpu_custom_call.1} parent=1 // pred_check_branch
      %62 = sbr.rel (0) target = $region45
    $region44: #{tpu_custom_call.1} parent=1 // pred_region
      %63 = dma.done [#allocation7], 512
    $region45: #{tpu_custom_call.1} parent=1 // pred_fallthru
      _
    // Predicated region
    $region46: #{tpu_custom_call.1} parent=1 // pred_check
      _
    $region47: #{tpu_custom_call.1} parent=1 // pred_check_branch
      %65 = sbr.rel (0) target = $region49
    $region48: #{tpu_custom_call.1} parent=1 // pred_region
      %66 = dma.done [#allocation10], 1536
    $region49: #{tpu_custom_call.1} parent=1 // pred_fallthru
      _
    %p68 = scmp.eq.s32.totalorder 0, 0
    // Predicated region
    $region50: #{tpu_custom_call.1} parent=1 // pred_check
      %p69 = pneg %p68
    $region51: #{tpu_custom_call.1} parent=1 // pred_check_branch
      %71 = sbr.rel (%p69) target = $region53
    $region52: #{tpu_custom_call.1} parent=1 // pred_region
      %vm72 = vcmask 57344
      %73 = vst.msk [vmem:[#allocation2] sm:$0x1] %vm72, -1e+30
      %74 = vst.msk [vmem:[#allocation3] sm:$0x1] %vm72, 0.0
      %75 = vst [vmem:[#allocation11] sm:$0xff] 0.0
    $region53: #{tpu_custom_call.1} parent=1 // pred_fallthru
      _
    %v76 = vld [vmem:[%s3] sm:$0xff]
    %v77 = vld [vmem:[%s1] sm:$0xff]
    %v78 = vld [vmem:[%s2] sm:$0xff]
    %s79 = sld [smem:[#allocation4]]
    %v80 = vld [vmem:[#allocation6] sm:$0xff]
    %v81 = vld [vmem:[#allocation6 + $0x8] sm:$0xff]
    %v82 = vld [vmem:[#allocation6 + $0x10] sm:$0xff]
    %v83 = vld [vmem:[#allocation6 + $0x18] sm:$0xff]
    %v84 = vld [vmem:[%s5] sm:$0x1]
    %v86 = vlaneseq
    %v87 = vshrl.u32 %v86, 7
    %v88 = vsub.s32 0, %v87
    %v89 = vrot.slane %v84, %v88
    %vm91 = vcmask 261120
    %v93 = vsel %vm91, %v76, 0
    %95 = vmatprep.subr.mxu0 0.0
    %96 = vmatpush1.msra.mxu0 0.0
    %97 = vmatprep.subr.mxu0 0.0
    %98 = vmatpush1.msra.mxu0 0.0
    %99 = vmatprep.subr.mxu0 0.0
    %100 = vmatpush1.msra.mxu0 0.0
    %101 = vmatprep.subr.mxu0 0.0
    %102 = vmatpush1.msra.mxu0 0.0
    %103 = vmatprep.subr.mxu0 0.0
    %104 = vmatpush1.msra.mxu0 0.0
    %105 = vmatprep.subr.mxu0 0.0
    %106 = vmatpush1.msra.mxu0 0.0
    %107 = vmatprep.subr.mxu0 0.0
    %108 = vmatpush1.msra.mxu0 0.0
    %109 = vmatprep.subr.mxu0 0.0
    %110 = vmatpush1.msra.mxu0 0.0
    %111 = vmatprep.subr.mxu0 0.0
    %112 = vmatpush1.msra.mxu0 0.0
    %113 = vmatprep.subr.mxu0 0.0
    %114 = vmatpush1.msra.mxu0 0.0
    %115 = vmatprep.subr.mxu0 0.0
    %116 = vmatpush1.msra.mxu0 0.0
    %117 = vmatprep.subr.mxu0 0.0
    %118 = vmatpush1.msra.mxu0 0.0
    %119 = vmatprep.subr.mxu0 0.0
    %120 = vmatpush1.msra.mxu0 %v83
    %121 = vmatprep.subr.mxu0 0.0
    %122 = vmatpush1.msra.mxu0 %v82
    %123 = vmatprep.subr.mxu0 0.0
    %124 = vmatpush1.msra.mxu0 %v81
    %125 = vmatprep.subr.mxu0 0.0
    %126 = vmatpush1.msra.mxu0 %v80
    %127 = vmatprep.subr.mxu0 0.0
    %128 = vmatpush2.msra.mxu0 0.0
    %129 = vmatprep.subr.mxu0 0.0
    %130 = vmatpush2.msra.mxu0 0.0
    %131 = vmatprep.subr.mxu0 0.0
    %132 = vmatpush2.msra.mxu0 0.0
    %133 = vmatprep.subr.mxu0 0.0
    %134 = vmatpush2.msra.mxu0 0.0
    %135 = vmatprep.subr.mxu0 0.0
    %136 = vmatpush2.msra.mxu0 0.0
    %137 = vmatprep.subr.mxu0 0.0
    %138 = vmatpush2.msra.mxu0 0.0
    %139 = vmatprep.subr.mxu0 0.0
    %140 = vmatpush2.msra.mxu0 0.0
    %141 = vmatprep.subr.mxu0 0.0
    %142 = vmatpush2.msra.mxu0 0.0
    %143 = vmatprep.subr.mxu0 0.0
    %144 = vmatpush2.msra.mxu0 0.0
    %145 = vmatprep.subr.mxu0 0.0
    %146 = vmatpush2.msra.mxu0 0.0
    %147 = vmatprep.subr.mxu0 0.0
    %148 = vmatpush2.msra.mxu0 0.0
    %149 = vmatprep.subr.mxu0 0.0
    %150 = vmatpush2.msra.mxu0 0.0
    %151 = vmatprep.subr.mxu0 0.0
    %152 = vmatpush2.msra.mxu0 0.0
    %153 = vmatprep.subr.mxu0 0.0
    %154 = vmatpush2.msra.mxu0 0.0
    %155 = vmatprep.subr.mxu0 0.0
    %156 = vmatpush2.msra.mxu0 0.0
    %157 = vmatprep.subr.mxu0 0.0
    %158 = vmatpush2.msra.mxu0 0.0
    %159 = vmatprep.mubr.f32.mxu0 0.0
    %160 = vmatmul.mubr.f32.gmra.mxu0 %v93
    %v161 = vpop.f32.mrf.mxu0
    %v162 = vadd.f32 %v89, %v161
    %v163 = vpop.f32.mrf.mxu0
    %164 = vdwg.mxu0
    %vm165 = vcmp.gt.f32.partialorder %v162, 0.0
    %v166 = vmul.f32 %v162, 1.442695
    %v167 = vpow.pop %v166
    %v168 = vsub.f32 %v167, 1.0
    %v169 = vmul.f32 %v168, 1.6732632
    %v170 = vsel %vm165, %v162, %v169
    %v171 = vmul.f32 %v170, 1.050701
    %v172 = vld [vmem:[%s6] sm:$0x1]
    %v174 = vlaneseq
    %v175 = vshrl.u32 %v174, 7
    %v176 = vsub.s32 0, %v175
    %v177 = vrot.slane %v172, %v176
    %v179 = vmul.f32 %v171, %v177
    %vm180 = vcmask 785408
    %v181 = vsel %vm180, %v179, 0.0
    %182 = vadd.xlane.f32.xlu0 %v181
    %v183 = vpop.xlane.xlu0 %182
    %v184 = vld [vmem:[#allocation5] sm:$0x1]
    %v186 = vlaneseq
    %v187 = vshrl.u32 %v186, 7
    %v188 = vsub.s32 0, %v187
    %v189 = vrot.slane %v184, %v188
    %v191 = vadd.f32 %v183, %v189
    %v192 = vld [vmem:[#allocation9] sm:$0xff]
    %v193 = vld [vmem:[#allocation9 + $0x8] sm:$0xff]
    %v194 = vld [vmem:[#allocation9 + $0x10] sm:$0xff]
    %v195 = vld [vmem:[#allocation9 + $0x18] sm:$0xff]
    %v196 = vld [vmem:[#allocation9 + $0x20] sm:$0xff]
    %v197 = vld [vmem:[#allocation9 + $0x28] sm:$0xff]
    %v198 = vld [vmem:[#allocation9 + $0x30] sm:$0xff]
    %v199 = vld [vmem:[#allocation9 + $0x38] sm:$0xff]
    %v200 = vld [vmem:[#allocation9 + $0x40] sm:$0xff]
    %v201 = vld [vmem:[#allocation9 + $0x48] sm:$0xff]
    %v202 = vld [vmem:[#allocation9 + $0x50] sm:$0xff]
    %v203 = vld [vmem:[#allocation9 + $0x58] sm:$0xff]
    %v204 = vld [vmem:[%s9] sm:$0x1]
    %v206 = vlaneseq
    %v207 = vshrl.u32 %v206, 7
    %v208 = vsub.s32 0, %v207
    %v209 = vrot.slane %v204, %v208
    %v212 = vsel %vm180, %v171, 0
    %214 = vmatprep.subr.mxu0 0.0
    %215 = vmatpush1.msra.mxu0 0.0
    %216 = vmatprep.subr.mxu0 0.0
    %217 = vmatpush1.msra.mxu0 0.0
    %218 = vmatprep.subr.mxu0 0.0
    %219 = vmatpush1.msra.mxu0 0.0
    %220 = vmatprep.subr.mxu0 0.0
    %221 = vmatpush1.msra.mxu0 0.0
    %222 = vmatprep.subr.mxu0 0.0
    %223 = vmatpush1.msra.mxu0 %v203
    %224 = vmatprep.subr.mxu0 0.0
    %225 = vmatpush1.msra.mxu0 %v202
    %226 = vmatprep.subr.mxu0 0.0
    %227 = vmatpush1.msra.mxu0 %v201
    %228 = vmatprep.subr.mxu0 0.0
    %229 = vmatpush1.msra.mxu0 %v200
    %230 = vmatprep.subr.mxu0 0.0
    %231 = vmatpush1.msra.mxu0 %v199
    %232 = vmatprep.subr.mxu0 0.0
    %233 = vmatpush1.msra.mxu0 %v198
    %234 = vmatprep.subr.mxu0 0.0
    %235 = vmatpush1.msra.mxu0 %v197
    %236 = vmatprep.subr.mxu0 0.0
    %237 = vmatpush1.msra.mxu0 %v196
    %238 = vmatprep.subr.mxu0 0.0
    %239 = vmatpush1.msra.mxu0 %v195
    %240 = vmatprep.subr.mxu0 0.0
    %241 = vmatpush1.msra.mxu0 %v194
    %242 = vmatprep.subr.mxu0 0.0
    %243 = vmatpush1.msra.mxu0 %v193
    %244 = vmatprep.subr.mxu0 0.0
    %245 = vmatpush1.msra.mxu0 %v192
    %246 = vmatprep.subr.mxu0 0.0
    %247 = vmatpush2.msra.mxu0 0.0
    %248 = vmatprep.subr.mxu0 0.0
    %249 = vmatpush2.msra.mxu0 0.0
    %250 = vmatprep.subr.mxu0 0.0
    %251 = vmatpush2.msra.mxu0 0.0
    %252 = vmatprep.subr.mxu0 0.0
    %253 = vmatpush2.msra.mxu0 0.0
    %254 = vmatprep.subr.mxu0 0.0
    %255 = vmatpush2.msra.mxu0 0.0
    %256 = vmatprep.subr.mxu0 0.0
    %257 = vmatpush2.msra.mxu0 0.0
    %258 = vmatprep.subr.mxu0 0.0
    %259 = vmatpush2.msra.mxu0 0.0
    %260 = vmatprep.subr.mxu0 0.0
    %261 = vmatpush2.msra.mxu0 0.0
    %262 = vmatprep.subr.mxu0 0.0
    %263 = vmatpush2.msra.mxu0 0.0
    %264 = vmatprep.subr.mxu0 0.0
    %265 = vmatpush2.msra.mxu0 0.0
    %266 = vmatprep.subr.mxu0 0.0
    %267 = vmatpush2.msra.mxu0 0.0
    %268 = vmatprep.subr.mxu0 0.0
    %269 = vmatpush2.msra.mxu0 0.0
    %270 = vmatprep.subr.mxu0 0.0
    %271 = vmatpush2.msra.mxu0 0.0
    %272 = vmatprep.subr.mxu0 0.0
    %273 = vmatpush2.msra.mxu0 0.0
    %274 = vmatprep.subr.mxu0 0.0
    %275 = vmatpush2.msra.mxu0 0.0
    %276 = vmatprep.subr.mxu0 0.0
    %277 = vmatpush2.msra.mxu0 0.0
    %278 = vmatprep.mubr.f32.mxu0 0.0
    %279 = vmatmul.mubr.f32.gmra.mxu0 %v212
    %v280 = vpop.f32.mrf.mxu0
    %v281 = vadd.f32 %v209, %v280
    %v282 = vpop.f32.mrf.mxu0
    %283 = vdwg.mxu0
    %vm284 = vcmp.gt.f32.partialorder %v281, 0.0
    %v285 = vmul.f32 %v281, 1.442695
    %v286 = vpow.pop %v285
    %v287 = vsub.f32 %v286, 1.0
    %v288 = vmul.f32 %v287, 1.6732632
    %v289 = vsel %vm284, %v281, %v288
    %v290 = vmul.f32 %v289, 1.050701
    %v291 = vlaneseq
    %v292 = vand.u32 %v291, 127
    %293 = vset.pattern.permute.xlu0 0
    %294 = vperm.xlu0 %293, %v77
    %v295 = vpop.permute.xlu0 %294
    %vm296 = vcmp.eq.s32.totalorder %v292, %v295
    %v297 = vsel %vm296, 1, 0
    %v298 = vcvt.s32.f32 %v297
    %300 = vset.pattern.permute.xlu0 0
    %301 = vperm.xlu0 %300, %v191
    %v302 = vpop.permute.xlu0 %301
    %v304 = vsel %vm296, %v302, -1e+30
    %vm305 = vcmask 64512
    %v306 = vsel %vm305, %v304, -inf
    %v307 = vrot.slane %v306, 4
    %v308 = vmax.f32 %v306, %v307
    %v309 = vrot.slane %v308, 2
    %v310 = vmax.f32 %v308, %v309
    %v311 = vrot.slane %v310, 1
    %v312 = vmax.f32 %v310, %v311
    %v313 = vld [vmem:[#allocation2] sm:$0x1]
    %v314 = vmax.f32 %v313, %v312
    %v315 = vsub.f32 %v313, %v314
    %v316 = vmul.f32 %v315, 1.442695
    %v317 = vpow.pop %v316
    %v319 = vlaneseq
    %v320 = vshrl.u32 %v319, 7
    %v321 = vsub.s32 0, %v320
    %v322 = vrot.slane %v314, %v321
    %v324 = vmul.f32 %v298, %v322
    %v325 = vsel %vm305, %v324, 0.0
    %326 = vadd.xlane.f32.xlu0 %v325
    %v327 = vpop.xlane.xlu0 %326
    %v328 = vmax.f32 %v78, 1e-10
    %v329 = vlog2.pop %v328
    %v330 = vmul.f32 %v329, 0.6931472
    %v331 = vsub.f32 %v191, %v327
    %v332 = vstv %s79
    %v333 = vmul.f32 %v332, %v330
    %v334 = vadd.f32 %v331, %v333
    %v335 = vmul.f32 %v334, 1.442695
    %v336 = vpow.pop %v335
    %v337 = vld [vmem:[#allocation3] sm:$0x1]
    %v338 = vmul.f32 %v317, %v337
    %340 = vset.pattern.permute.xlu0 0
    %341 = vperm.xlu0 %340, %v336
    %v342 = vpop.permute.xlu0 %341
    %v344 = vmul.f32 %v298, %v342
    %v345 = vsel %vm305, %v344, 0.0
    %v346 = vrot.slane %v345, 4
    %v347 = vadd.f32 %v345, %v346
    %v348 = vrot.slane %v347, 2
    %v349 = vadd.f32 %v347, %v348
    %v350 = vrot.slane %v349, 1
    %v351 = vadd.f32 %v349, %v350
    %v352 = vadd.f32 %v338, %v351
    %vm353 = vcmask 57344
    %354 = vst.msk [vmem:[#allocation3] sm:$0x1] %vm353, %v352
    %v355 = vmul.f32 %v342, %v290
    %v356 = vpack.c.bf16 %v355, %v355
    %v357 = vpack.c.bf16 %v298, %v298
    %358 = vxpose.xlu0.c.b16.start [1/8] %v357, 128
    %359 = vxpose.xlu0.c.b16.cont [2/8] 0, 128
    %360 = vxpose.xlu0.c.b16.cont [3/8] 0, 128
    %361 = vxpose.xlu0.c.b16.cont [4/8] 0, 128
    %362 = vxpose.xlu0.c.b16.cont [5/8] 0, 128
    %363 = vxpose.xlu0.c.b16.cont [6/8] 0, 128
    %364 = vxpose.xlu0.c.b16.cont [7/8] 0, 128
    %365 = vxpose.xlu0.c.b16.end [8/8] 0, 128
    %v366 = vpop.trf.xlu0
    %v367 = vpop.trf.xlu0
    %v368 = vpop.trf.xlu0
    %v369 = vpop.trf.xlu0
    %v370 = vpop.trf.xlu0
    %v371 = vpop.trf.xlu0
    %v372 = vpop.trf.xlu0
    %v373 = vpop.trf.xlu0
    %v375 = vsel %vm305, %v366, 0
    %vm377 = vcmask 1043456
    %v379 = vsel %vm377, %v356, 0
    %381 = vmatprep.subr.bf16.mxu0 0
    %382 = vmatpush1.bf16.msra.mxu0 0
    %383 = vmatprep.subr.bf16.mxu0 0
    %384 = vmatpush1.bf16.msra.mxu0 0
    %385 = vmatprep.subr.bf16.mxu0 0
    %386 = vmatpush1.bf16.msra.mxu0 0
    %387 = vmatprep.subr.bf16.mxu0 0
    %388 = vmatpush1.bf16.msra.mxu0 0
    %389 = vmatprep.subr.bf16.mxu0 0
    %390 = vmatpush1.bf16.msra.mxu0 0
    %391 = vmatprep.subr.bf16.mxu0 0
    %392 = vmatpush1.bf16.msra.mxu0 0
    %393 = vmatprep.subr.bf16.mxu0 0
    %394 = vmatpush1.bf16.msra.mxu0 0
    %395 = vmatprep.subr.bf16.mxu0 0
    %396 = vmatpush1.bf16.msra.mxu0 %v379
    %397 = vmatprep.subr.bf16.mxu0 0
    %398 = vmatpush2.bf16.msra.mxu0 0
    %399 = vmatprep.subr.bf16.mxu0 0
    %400 = vmatpush2.bf16.msra.mxu0 0
    %401 = vmatprep.subr.bf16.mxu0 0
    %402 = vmatpush2.bf16.msra.mxu0 0
    %403 = vmatprep.subr.bf16.mxu0 0
    %404 = vmatpush2.bf16.msra.mxu0 0
    %405 = vmatprep.subr.bf16.mxu0 0
    %406 = vmatpush2.bf16.msra.mxu0 0
    %407 = vmatprep.subr.bf16.mxu0 0
    %408 = vmatpush2.bf16.msra.mxu0 0
    %409 = vmatprep.subr.bf16.mxu0 0
    %410 = vmatpush2.bf16.msra.mxu0 0
    %411 = vmatprep.subr.bf16.mxu0 0
    %412 = vmatpush2.bf16.msra.mxu0 0
    %413 = vmatprep.mubr.bf16.mxu0 0
    %414 = vmatmul.mubr.bf16.gmra.mxu0 %v375
    %v415 = vpop.f32.mrf.mxu0
    %v416 = vadd.f32 0.0, %v415
    %v417 = vpop.f32.mrf.mxu0
    %v418 = vpop.f32.mrf.mxu0
    %v419 = vpop.f32.mrf.mxu0
    %420 = vdwg.mxu0
    %v421 = vlaneseq
    %v422 = vshrl.u32 %v421, 7
    %v423 = vsub.s32 0, %v422
    %v424 = vrot.slane %v317, %v423
    %426 = vbcast.lane.b32.xlu0 %v424, 256
    %v427 = vpop.permute.xlu0 %426
    %v428 = vld [vmem:[#allocation11] sm:$0xff]
    %v429 = vmul.f32 %v427, %v428
    %v430 = vadd.f32 %v429, %v416
    %431 = vst [vmem:[#allocation11] sm:$0xff] %v430
    %432 = vst.msk [vmem:[#allocation2] sm:$0x1] %vm353, %v314
    // Predicated region
    $region54: #{tpu_custom_call.1} parent=1 // pred_check
      %p433 = pneg %p68
    $region55: #{tpu_custom_call.1} parent=1 // pred_check_branch
      %435 = sbr.rel (%p433) target = $region57
    $region56: #{tpu_custom_call.1} parent=1 // pred_region
      %v436 = vld [vmem:[#allocation3] sm:$0x1]
      %v437 = vlaneseq
      %v438 = vshrl.u32 %v437, 7
      %v439 = vsub.s32 0, %v438
      %v440 = vrot.slane %v436, %v439
      %442 = vbcast.lane.b32.xlu0 %v440, 256
      %v443 = vpop.permute.xlu0 %442
      %v444 = vld [vmem:[#allocation11] sm:$0xff]
      %v445 = vadd.f32 %v443, 1e-10
      %v446 = vrcp.pop %v445
      %v447 = vmul.f32 %v444, %v446
      %448 = vst [vmem:[#allocation11] sm:$0xff] %v447
    $region57: #{tpu_custom_call.1} parent=1 // pred_fallthru
      _
    // Predicated region
    $region58: #{tpu_custom_call.1} parent=1 // pred_check
      _
    $region59: #{tpu_custom_call.1} parent=1 // pred_check_branch
      %450 = sbr.rel (0) target = $region61
    $region60: #{tpu_custom_call.1} parent=1 // pred_region
      %s452 = ssub.s32 128, 128
      %453 = vsyncadd [#allocation8], %s452
      %s455 = sshll.u32 [#allocation11], 4
      %s456 = int_to_ptr.vmem [resolvable:$true] %s455
      %458 = dma.vmem_to_hbm [thread:$0]  %s456, 128, %s10, [#allocation8]
    $region61: #{tpu_custom_call.1} parent=1 // pred_fallthru
      _
    // Predicated region
    $region62: #{tpu_custom_call.1} parent=1 // pred_check
      _
    $region63: #{tpu_custom_call.1} parent=1 // pred_check_branch
      %460 = sbr.rel (0) target = $region65
    $region64: #{tpu_custom_call.1} parent=1 // pred_region
      %461 = dma.done [#allocation8], 128
    $region65: #{tpu_custom_call.1} parent=1 // pred_fallthru
      _
    %462 = vsyncpa [#allocation7], 1
    %463 = vsyncpa [#allocation10], 1
    %464 = vsyncpa [#allocation8], 1

</llo_original>
